<compile_context>
chip_gen: v6e
topology: v6e:2x2x1
jax: 0.10.0
libtpu: 0.0.40
codegen_flags: <defaults>
</compile_context>

<pallas_src>
import math
import functools

import jax
import jax.numpy as jnp
from jax.experimental import pallas as pl
from jax.experimental.pallas import tpu as pltpu


def _round_up(x, m):
    return ((x + m - 1) // m) * m


# ----------------------------------------------------------------------------
# Kernels
# ----------------------------------------------------------------------------

def _mxu_kernel(x_ref, w_ref, b_ref, o_ref):
    """Packed complex matmul (real|imag concatenated) + bias.

    x : (F_TILE, B, 2*Cin)        packed rFFT band (real | imag on channels)
    w : (F_TILE, 2*Cin, 2*Cout)   packed weight [[wr, wi], [-wi, wr]]
    b : (F_TILE, 2*Cout)          packed bias (br | bi)
    o : (F_TILE, B, 2*Cout)       packed band output (real | imag)
    """
    out = jnp.einsum('fbi,fio->fbo', x_ref[...], w_ref[...],
                     preferred_element_type=jnp.float32)
    o_ref[...] = out + b_ref[...][:, None, :]


def _vpu_kernel(x_ref, w_ref, b_ref, o_ref):
    """Tiny-channel path: F on the 128-lane axis, VPU broadcast-FMA.

    x : (2, B, Cin, F_TILE)    [0]=real, [1]=imag
    w : (2, Cin, Cout, F_TILE)
    b : (2, Cout, F_TILE)
    o : (2, B, Cout, F_TILE)
    """
    xr = x_ref[0]                      # (B, Cin, Ft)
    xi = x_ref[1]
    wr = w_ref[0]                      # (Cin, Cout, Ft)
    wi = w_ref[1]

    xr4 = xr[:, :, None, :]            # (B, Cin, 1, Ft)
    xi4 = xi[:, :, None, :]

    # out[b,o,f] = sum_i x[b,i,f] * w[i,o,f]   (complex, expanded)
    out_r = jnp.sum(xr4 * wr[None] - xi4 * wi[None], axis=1)   # (B, Cout, Ft)
    out_i = jnp.sum(xr4 * wi[None] + xi4 * wr[None], axis=1)

    o_ref[0] = out_r + b_ref[0][None]
    o_ref[1] = out_i + b_ref[1][None]


# ----------------------------------------------------------------------------
# pallas_call wrappers (frequency-tiled, pipelined, "parallel" grid axis)
# ----------------------------------------------------------------------------

def _mxu_call(xp, wp, bp, f_tile):
    fp, b, ci2 = xp.shape
    co2 = wp.shape[-1]
    return pl.pallas_call(
        _mxu_kernel,
        out_shape=jax.ShapeDtypeStruct((fp, b, co2), jnp.float32),
        grid_spec=pltpu.PrefetchScalarGridSpec(
            num_scalar_prefetch=0,
            grid=(fp // f_tile,),
            in_specs=[
                pl.BlockSpec((f_tile, b, ci2), lambda f: (f, 0, 0)),
                pl.BlockSpec((f_tile, ci2, co2), lambda f: (f, 0, 0)),
                pl.BlockSpec((f_tile, co2), lambda f: (f, 0)),
            ],
            out_specs=pl.BlockSpec((f_tile, b, co2), lambda f: (f, 0, 0)),
        ),
        compiler_params=pltpu.CompilerParams(
            dimension_semantics=("parallel",)),
    )(xp, wp, bp)


def _vpu_call(xp, wp, bp, f_tile):
    _, b, cin, fp = xp.shape
    cout = wp.shape[2]
    return pl.pallas_call(
        _vpu_kernel,
        out_shape=jax.ShapeDtypeStruct((2, b, cout, fp), jnp.float32),
        grid_spec=pltpu.PrefetchScalarGridSpec(
            num_scalar_prefetch=0,
            grid=(fp // f_tile,),
            in_specs=[
                pl.BlockSpec((2, b, cin, f_tile), lambda f: (0, 0, 0, f)),
                pl.BlockSpec((2, cin, cout, f_tile), lambda f: (0, 0, 0, f)),
                pl.BlockSpec((2, cout, f_tile), lambda f: (0, 0, f)),
            ],
            out_specs=pl.BlockSpec((2, b, cout, f_tile), lambda f: (0, 0, 0, f)),
        ),
        compiler_params=pltpu.CompilerParams(
            dimension_semantics=("parallel",)),
    )(xp, wp, bp)


# ----------------------------------------------------------------------------
# Module
# ----------------------------------------------------------------------------

class BandedFourierLayerPallas:
    """JAX/Pallas re-implementation of the PyTorch BandedFourierLayer."""

    def __init__(self, in_channels, out_channels, band, num_bands, length,
                 key=None, use_mxu=None, compute_dtype=jnp.float32):
        if key is None:
            key = jax.random.PRNGKey(0)
        self.length = length
        self.total_freqs = length // 2 + 1
        self.in_channels = in_channels
        self.out_channels = out_channels
        self.band = band
        self.num_bands = num_bands
        self.num_freqs = (self.total_freqs // num_bands
                          + (self.total_freqs % num_bands
                             if band == num_bands - 1 else 0))
        self.start = band * (self.total_freqs // num_bands)
        self.end = self.start + self.num_freqs
        # compute_dtype lets you run the MXU path with bf16 inputs (f32 accum)
        # on v6e/v7x; default f32 keeps bit-exact-ish numerics for the check.
        self.compute_dtype = compute_dtype

        # Deterministic init mimicking kaiming_uniform_(a=sqrt(5)) on a
        # (num_freqs, in, out) tensor: fan_in = in * out.
        fan_in = in_channels * out_channels
        gain = math.sqrt(2.0 / (1.0 + 5.0))
        w_bound = gain * math.sqrt(3.0 / fan_in)
        b_bound = 1.0 / math.sqrt(fan_in)

        k_wr, k_wi, k_br, k_bi = jax.random.split(key, 4)
        wshape = (self.num_freqs, in_channels, out_channels)
        bshape = (self.num_freqs, out_channels)
        self.weight_r = jax.random.uniform(k_wr, wshape, jnp.float32,
                                           -w_bound, w_bound)
        self.weight_i = jax.random.uniform(k_wi, wshape, jnp.float32,
                                           -w_bound, w_bound)
        self.bias_r = jax.random.uniform(k_br, bshape, jnp.float32,
                                         -b_bound, b_bound)
        self.bias_i = jax.random.uniform(k_bi, bshape, jnp.float32,
                                         -b_bound, b_bound)

        # --- choose compute path & tile size, pre-pack parameters -----------
        if use_mxu is None:
            use_mxu = min(in_channels, out_channels) >= 64
        self.use_mxu = bool(use_mxu)

        F = self.num_freqs
        if self.use_mxu:
            # Size F_TILE so the double-buffered packed-weight tile stays well
            # under the scoped VMEM limit (v7x: 64 MiB physical / ~32 scoped).
            itemsize = jnp.dtype(compute_dtype).itemsize
            w_row_bytes = (2 * in_channels) * (2 * out_channels) * itemsize
            f_tile = 8
            while f_tile > 1 and 2 * f_tile * w_row_bytes > (16 << 20):
                f_tile //= 2
            self.f_tile = f_tile
            self.f_pad = _round_up(F, self.f_tile)
            pad = self.f_pad - F
            # W_packed = [[wr, wi], [-wi, wr]]  : (F, 2*Cin, 2*Cout)
            top = jnp.concatenate([self.weight_r, self.weight_i], axis=-1)
            bot = jnp.concatenate([-self.weight_i, self.weight_r], axis=-1)
            wp = jnp.concatenate([top, bot], axis=1)
            self.w_packed = jnp.pad(
                wp, ((0, pad), (0, 0), (0, 0))).astype(compute_dtype)
            bp = jnp.concatenate([self.bias_r, self.bias_i], axis=-1)
            self.b_packed = jnp.pad(bp, ((0, pad), (0, 0)))
        else:
            self.f_tile = 128                      # F on the 128-lane axis
            self.f_pad = _round_up(F, self.f_tile)
            pad = self.f_pad - F
            wr_t = jnp.transpose(self.weight_r, (1, 2, 0))   # (Cin, Cout, F)
            wi_t = jnp.transpose(self.weight_i, (1, 2, 0))
            wp = jnp.stack([wr_t, wi_t], axis=0)             # (2, Cin, Cout, F)
            self.w_packed = jnp.pad(wp, ((0, 0), (0, 0), (0, 0), (0, pad)))
            bp = jnp.stack([self.bias_r.T, self.bias_i.T], axis=0)  # (2,Cout,F)
            self.b_packed = jnp.pad(bp, ((0, 0), (0, 0), (0, pad)))

    # ------------------------------------------------------------------ call
    @functools.partial(jax.jit, static_argnums=0)
    def __call__(self, x):
        # x: (B, T, Cin) float32
        b, t, _ = x.shape
        # TODO(synk): rfft/irfft have no Pallas equivalent; they stay in XLA.
        x_fft = jnp.fft.rfft(x, axis=1)                   # (B, T//2+1, Cin) c64
        band = x_fft[:, self.start:self.end]              # (B, F, Cin)

        if self.use_mxu:
            band_out = self._forward_mxu(band)            # (B, F, Cout) c64
        else:
            band_out = self._forward_vpu(band)

        out_fft = jnp.zeros((b, t // 2 + 1, self.out_channels), jnp.complex64)
        out_fft = out_fft.at[:, self.start:self.end].set(band_out)
        return jnp.fft.irfft(out_fft, n=t, axis=1)        # (B, T, Cout)

    def _forward_mxu(self, band):
        F = self.num_freqs
        cout = self.out_channels
        xr = jnp.real(band)                                # (B, F, Cin)
        xi = jnp.imag(band)
        xp = jnp.concatenate([xr, xi], axis=-1)            # (B, F, 2*Cin)
        xp = jnp.transpose(xp, (1, 0, 2))                  # (F, B, 2*Cin)
        xp = jnp.pad(xp, ((0, self.f_pad - F), (0, 0), (0, 0)))
        xp = xp.astype(self.compute_dtype)

        out = _mxu_call(xp, self.w_packed, self.b_packed, self.f_tile)
        out = out[:F]                                      # (F, B, 2*Cout)
        band_out = out[..., :cout] + 1j * out[..., cout:]
        return jnp.transpose(band_out, (1, 0, 2)).astype(jnp.complex64)

    def _forward_vpu(self, band):
        F = self.num_freqs
        xr = jnp.transpose(jnp.real(band), (0, 2, 1))      # (B, Cin, F)
        xi = jnp.transpose(jnp.imag(band), (0, 2, 1))
        xp = jnp.stack([xr, xi], axis=0)                   # (2, B, Cin, F)
        xp = jnp.pad(xp, ((0, 0), (0, 0), (0, 0), (0, self.f_pad - F)))

        out = _vpu_call(xp, self.w_packed, self.b_packed, self.f_tile)
        out = out[..., :F]                                 # (2, B, Cout, F)
        band_out = (out[0] + 1j * out[1]).astype(jnp.complex64)
        return jnp.transpose(band_out, (0, 2, 1))          # (B, F, Cout)

    # pure-JAX reference (no Pallas) for verification
    def reference(self, x):
        b, t, _ = x.shape
        x_fft = jnp.fft.rfft(x, axis=1)
        band = x_fft[:, self.start:self.end]
        weight = self.weight_r + 1j * self.weight_i
        bias = self.bias_r + 1j * self.bias_i
        band_out = jnp.einsum('bti,tio->bto', band, weight) + bias
        out_fft = jnp.zeros((b, t // 2 + 1, self.out_channels), jnp.complex64)
        out_fft = out_fft.at[:, self.start:self.end].set(band_out)
        return jnp.fft.irfft(out_fft, n=t, axis=1)


# ----------------------------------------------------------------------------
# Self-test
# ----------------------------------------------------------------------------

if __name__ == "__main__":
    # --- test 1: tiny channels -> lane-dense VPU path -----------------------
    # batch=2, length=16, in=out=4, num_bands=2, band=1
    #   total_freqs=9, num_freqs=5, start=4, end=9
    B, T, CIN, COUT = 2, 16, 4, 4
    layer = BandedFourierLayerPallas(CIN, COUT, band=1, num_bands=2, length=T,
                                     key=jax.random.PRNGKey(0))
    x = jax.random.normal(jax.random.PRNGKey(1), (B, T, CIN), jnp.float32)
    out = jax.block_until_ready(layer(x))
    ref = layer.reference(x)
    assert out.shape == (B, T, COUT)
    assert jnp.allclose(out, ref, atol=1e-4, rtol=1e-4), "VPU path mismatch"

    # --- test 2: VPU path, multi-tile grid + tail padding --------------------
    # length=384 -> total_freqs=193 -> F_pad=256, grid=(2,)
    T2 = 384
    layer2 = BandedFourierLayerPallas(4, 4, band=0, num_bands=1, length=T2,
                                      key=jax.random.PRNGKey(2))
    x2 = jax.random.normal(jax.random.PRNGKey(3), (2, T2, 4), jnp.float32)
    out2 = jax.block_until_ready(layer2(x2))
    ref2 = layer2.reference(x2)
    assert out2.shape == (2, T2, 4)
    assert jnp.allclose(out2, ref2, atol=1e-4, rtol=1e-4), \
        "VPU multi-tile mismatch"

    # --- test 3: wide channels -> packed single-matmul MXU path --------------
    # length=32, C=128 -> total_freqs=17, F_pad=24, f_tile=8, grid=(3,)
    T3, C3 = 32, 128
    layer3 = BandedFourierLayerPallas(C3, C3, band=0, num_bands=1, length=T3,
                                      key=jax.random.PRNGKey(4))
    x3 = jax.random.normal(jax.random.PRNGKey(5), (2, T3, C3), jnp.float32)
    out3 = jax.block_until_ready(layer3(x3))
    ref3 = layer3.reference(x3)
    assert out3.shape == (2, T3, C3)
    assert jnp.allclose(out3, ref3, atol=1e-4, rtol=1e-4), "MXU path mismatch"

    print("KERNEL_OK")
</pallas_src>

<mosaic_0001>
module attributes {stable_mosaic.version = 11 : i64} {
  func.func @_vpu_kernel(%arg0: i32, %arg1: memref<2x2x4x128xf32, #tpu.memory_space<vmem>>, %arg2: memref<2x4x4x128xf32, #tpu.memory_space<vmem>>, %arg3: memref<2x4x128xf32, #tpu.memory_space<vmem>>, %arg4: memref<2x2x4x128xf32, #tpu.memory_space<vmem>>) attributes {dimension_semantics = [#tpu.dimension_semantics<parallel>], iteration_bounds = array<i64: 1>, scalar_prefetch = 0 : i64, scratch_operands = 0 : i64, tpu.core_type = #tpu.core_type<tc>, window_params = [{transform_indices = @transform_0, window_bounds = array<i64: 2, 2, 4, 128>}, {transform_indices = @transform_1, window_bounds = array<i64: 2, 4, 4, 128>}, {transform_indices = @transform_2, window_bounds = array<i64: 2, 4, 128>}, {transform_indices = @transform_3, window_bounds = array<i64: 2, 2, 4, 128>}]} {
    %c0 = arith.constant 0 : index
    %c0_0 = arith.constant 0 : index
    %c0_1 = arith.constant 0 : index
    %c0_2 = arith.constant 0 : index
    %0 = vector.load %arg1[%c0, %c0_0, %c0_1, %c0_2] : memref<2x2x4x128xf32, #tpu.memory_space<vmem>>, vector<1x2x4x128xf32>
    %1 = vector.shape_cast %0 : vector<1x2x4x128xf32> to vector<2x4x128xf32>
    %c1 = arith.constant 1 : index
    %c0_3 = arith.constant 0 : index
    %c0_4 = arith.constant 0 : index
    %c0_5 = arith.constant 0 : index
    %2 = vector.load %arg1[%c1, %c0_3, %c0_4, %c0_5] : memref<2x2x4x128xf32, #tpu.memory_space<vmem>>, vector<1x2x4x128xf32>
    %3 = vector.shape_cast %2 : vector<1x2x4x128xf32> to vector<2x4x128xf32>
    %c0_6 = arith.constant 0 : index
    %c0_7 = arith.constant 0 : index
    %c0_8 = arith.constant 0 : index
    %c0_9 = arith.constant 0 : index
    %4 = vector.load %arg2[%c0_6, %c0_7, %c0_8, %c0_9] : memref<2x4x4x128xf32, #tpu.memory_space<vmem>>, vector<1x4x4x128xf32>
    %5 = vector.shape_cast %4 : vector<1x4x4x128xf32> to vector<4x4x128xf32>
    %c1_10 = arith.constant 1 : index
    %c0_11 = arith.constant 0 : index
    %c0_12 = arith.constant 0 : index
    %c0_13 = arith.constant 0 : index
    %6 = vector.load %arg2[%c1_10, %c0_11, %c0_12, %c0_13] : memref<2x4x4x128xf32, #tpu.memory_space<vmem>>, vector<1x4x4x128xf32>
    %7 = vector.shape_cast %6 : vector<1x4x4x128xf32> to vector<4x4x128xf32>
    %8 = vector.shape_cast %1 : vector<2x4x128xf32> to vector<2x4x1x128xf32>
    %9 = vector.shape_cast %3 : vector<2x4x128xf32> to vector<2x4x1x128xf32>
    %10 = vector.shape_cast %5 : vector<4x4x128xf32> to vector<1x4x4x128xf32>
    %11 = vector.broadcast %8 : vector<2x4x1x128xf32> to vector<2x4x4x128xf32>
    %12 = vector.broadcast %10 : vector<1x4x4x128xf32> to vector<2x4x4x128xf32>
    %13 = arith.mulf %11, %12 : vector<2x4x4x128xf32>
    %14 = vector.shape_cast %7 : vector<4x4x128xf32> to vector<1x4x4x128xf32>
    %15 = vector.broadcast %9 : vector<2x4x1x128xf32> to vector<2x4x4x128xf32>
    %16 = vector.broadcast %14 : vector<1x4x4x128xf32> to vector<2x4x4x128xf32>
    %17 = arith.mulf %15, %16 : vector<2x4x4x128xf32>
    %18 = arith.subf %13, %17 : vector<2x4x4x128xf32>
    %cst = arith.constant dense<0.000000e+00> : vector<2x4x128xf32>
    %19 = vector.multi_reduction <add>, %18, %cst [1] : vector<2x4x4x128xf32> to vector<2x4x128xf32>
    %20 = vector.shape_cast %7 : vector<4x4x128xf32> to vector<1x4x4x128xf32>
    %21 = vector.broadcast %8 : vector<2x4x1x128xf32> to vector<2x4x4x128xf32>
    %22 = vector.broadcast %20 : vector<1x4x4x128xf32> to vector<2x4x4x128xf32>
    %23 = arith.mulf %21, %22 : vector<2x4x4x128xf32>
    %24 = vector.shape_cast %5 : vector<4x4x128xf32> to vector<1x4x4x128xf32>
    %25 = vector.broadcast %9 : vector<2x4x1x128xf32> to vector<2x4x4x128xf32>
    %26 = vector.broadcast %24 : vector<1x4x4x128xf32> to vector<2x4x4x128xf32>
    %27 = arith.mulf %25, %26 : vector<2x4x4x128xf32>
    %28 = arith.addf %23, %27 : vector<2x4x4x128xf32>
    %cst_14 = arith.constant dense<0.000000e+00> : vector<2x4x128xf32>
    %29 = vector.multi_reduction <add>, %28, %cst_14 [1] : vector<2x4x4x128xf32> to vector<2x4x128xf32>
    %c0_15 = arith.constant 0 : index
    %c0_16 = arith.constant 0 : index
    %c0_17 = arith.constant 0 : index
    %30 = vector.load %arg3[%c0_15, %c0_16, %c0_17] : memref<2x4x128xf32, #tpu.memory_space<vmem>>, vector<1x4x128xf32>
    %31 = vector.shape_cast %30 : vector<1x4x128xf32> to vector<4x128xf32>
    %32 = vector.shape_cast %31 : vector<4x128xf32> to vector<1x4x128xf32>
    %33 = vector.broadcast %32 : vector<1x4x128xf32> to vector<2x4x128xf32>
    %34 = arith.addf %19, %33 : vector<2x4x128xf32>
    %c0_18 = arith.constant 0 : index
    %c0_19 = arith.constant 0 : index
    %c0_20 = arith.constant 0 : index
    %c0_21 = arith.constant 0 : index
    %35 = vector.load %arg4[%c0_18, %c0_19, %c0_20, %c0_21] : memref<2x2x4x128xf32, #tpu.memory_space<vmem>>, vector<1x2x4x128xf32>
    %36 = vector.shape_cast %35 : vector<1x2x4x128xf32> to vector<2x4x128xf32>
    %37 = vector.shape_cast %34 : vector<2x4x128xf32> to vector<1x2x4x128xf32>
    tpu.vector_store %arg4[%c0_18, %c0_19, %c0_20, %c0_21], %37 {strides = array<i32>} : memref<2x2x4x128xf32, #tpu.memory_space<vmem>>, vector<1x2x4x128xf32>,
    %c1_22 = arith.constant 1 : index
    %c0_23 = arith.constant 0 : index
    %c0_24 = arith.constant 0 : index
    %38 = vector.load %arg3[%c1_22, %c0_23, %c0_24] : memref<2x4x128xf32, #tpu.memory_space<vmem>>, vector<1x4x128xf32>
    %39 = vector.shape_cast %38 : vector<1x4x128xf32> to vector<4x128xf32>
    %40 = vector.shape_cast %39 : vector<4x128xf32> to vector<1x4x128xf32>
    %41 = vector.broadcast %40 : vector<1x4x128xf32> to vector<2x4x128xf32>
    %42 = arith.addf %29, %41 : vector<2x4x128xf32>
    %c1_25 = arith.constant 1 : index
    %c0_26 = arith.constant 0 : index
    %c0_27 = arith.constant 0 : index
    %c0_28 = arith.constant 0 : index
    %43 = vector.load %arg4[%c1_25, %c0_26, %c0_27, %c0_28] : memref<2x2x4x128xf32, #tpu.memory_space<vmem>>, vector<1x2x4x128xf32>
    %44 = vector.shape_cast %43 : vector<1x2x4x128xf32> to vector<2x4x128xf32>
    %45 = vector.shape_cast %42 : vector<2x4x128xf32> to vector<1x2x4x128xf32>
    tpu.vector_store %arg4[%c1_25, %c0_26, %c0_27, %c0_28], %45 {strides = array<i32>} : memref<2x2x4x128xf32, #tpu.memory_space<vmem>>, vector<1x2x4x128xf32>,
    return
  }
  func.func @transform_0(%arg0: i32) -> (i32, i32, i32, i32) {
    %c0_i32 = arith.constant 0 : i32
    %c0_i32_0 = arith.constant 0 : i32
    %c0_i32_1 = arith.constant 0 : i32
    %c0_i32_2 = arith.constant 0 : i32
    return %c0_i32, %c0_i32_0, %c0_i32_1, %arg0 : i32, i32, i32, i32
  }
  func.func @transform_1(%arg0: i32) -> (i32, i32, i32, i32) {
    %c0_i32 = arith.constant 0 : i32
    %c0_i32_0 = arith.constant 0 : i32
    %c0_i32_1 = arith.constant 0 : i32
    %c0_i32_2 = arith.constant 0 : i32
    return %c0_i32, %c0_i32_0, %c0_i32_1, %arg0 : i32, i32, i32, i32
  }
  func.func @transform_2(%arg0: i32) -> (i32, i32, i32) {
    %c0_i32 = arith.constant 0 : i32
    %c0_i32_0 = arith.constant 0 : i32
    %c0_i32_1 = arith.constant 0 : i32
    return %c0_i32, %c0_i32_0, %arg0 : i32, i32, i32
  }
  func.func @transform_3(%arg0: i32) -> (i32, i32, i32, i32) {
    %c0_i32 = arith.constant 0 : i32
    %c0_i32_0 = arith.constant 0 : i32
    %c0_i32_1 = arith.constant 0 : i32
    %c0_i32_2 = arith.constant 0 : i32
    return %c0_i32, %c0_i32_0, %c0_i32_1, %arg0 : i32, i32, i32, i32
  }
}

</mosaic_0001>

<llo_original>
// kernel: reverse.1
$region0: #{reverse.1}
  %s0 = inlined_call_operand.vmem [shape: f32[2,4,7], index: 0, kind: input, shape index: {}]
  %s1 = inlined_call_operand.vmem [shape: f32[2,4,7], index: 1, kind: output, shape index: {}]
  %v2 = vlaneseq
  %v3 = vsub.s32 6, %v2
  %4 = vset.pattern.permute.xlu0 %v3
  $region1: #{reverse.1} parent=0
    #allocation0 [shape = 'u8[8192]{0}', space=vmem, size = 0x2000, scoped, tag = 'operand span for operand 0']
    #allocation1 [shape = 'u8[4096]{0}', space=vmem, size = 0x1000, scoped, tag = 'packed  for operand 0']
    #allocation2 [shape = 'u8[8192]{0}', space=vmem, size = 0x2000, scoped, tag = 'operand span for operand 1']
    #allocation3 [shape = 'u8[4096]{0}', space=vmem, size = 0x1000, scoped, tag = 'packed  for operand 1']
    // Predicated region
    $region2: #{reverse.1} parent=1 // pred_check
      _
    $region3: #{reverse.1} parent=1 // pred_check_branch
      %6 = sbr.rel (0) target = $region5
    $region4: #{reverse.1} parent=1 // pred_region
      // Predicated region
      $region6: #{reverse.1} parent=4 // pred_check
        _
      $region7: #{reverse.1} parent=4 // pred_check_branch
        %8 = sbr.rel target = $region9
      $region8: #{reverse.1} parent=4 // pred_region
        // Predicated region
        $region21: #{reverse.1} parent=8 // pred_check
          _
        $region22: #{reverse.1} parent=8 // pred_check_branch
          %26 = sbr.rel (0) target = $region24
        $region23: #{reverse.1} parent=8 // pred_region
          loop: start=0, step=1, limit=1
          $region25: #{reverse.1} parent=23 // loop_pre_header
            _
          $region26: #{reverse.1} parent=23 // loop_header
            %s28 = sphi 0, %s32
            %p29 = scmp.ge.s32.totalorder %s28, 1
            %s33 = sphi %s0, %s0
            %s34 = sphi [#allocation1], [#allocation1]
          $region27: #{reverse.1} parent=23 // loop_header_branch
            %31 = sbr.rel (%p29) target = $region31
          $region28: #{reverse.1} parent=23 // loop_body
            _
          $region29: #{reverse.1} parent=23 // loop_footer
            %s32 = sadd.s32 1, %s28
          $region30: #{reverse.1} parent=23 // loop_footer_branch
            %27 = sbr.rel target = $region26
          $region31: #{reverse.1} parent=23 // loop_exit
            _
          %s36 = ssub.s32 16, 1
          loop: start=0, step=1, limit=1
          $region32: #{reverse.1} parent=23 // loop_pre_header
            _
          $region33: #{reverse.1} parent=23 // loop_header
            %s38 = sphi 0, %s42
            %p39 = scmp.ge.s32.totalorder %s38, 1
            %s43 = sphi %s0, %s0
            %s44 = sphi [#allocation1], [#allocation1]
          $region34: #{reverse.1} parent=23 // loop_header_branch
            %41 = sbr.rel (%p39) target = $region38
          $region35: #{reverse.1} parent=23 // loop_body
            %v45 = vld [vmem:[%s43] sm:%s36]
            %46 = vst [vmem:[%s44] sm:%s36] %v45
            %v47 = vld [vmem:[%s43 + $0x4] sm:%s36]
            %48 = vst [vmem:[%s44 + $0x4] sm:%s36] %v47
          $region36: #{reverse.1} parent=23 // loop_footer
            %s42 = sadd.s32 1, %s38
          $region37: #{reverse.1} parent=23 // loop_footer_branch
            %37 = sbr.rel target = $region33
          $region38: #{reverse.1} parent=23 // loop_exit
            _
        $region24: #{reverse.1} parent=8 // pred_fallthru
          _
      $region9: #{reverse.1} parent=4 // pred_fallthru
        _
      // Predicated region
      $region10: #{reverse.1} parent=4 // pred_check
        _
      $region11: #{reverse.1} parent=4 // pred_check_branch
        %10 = sbr.rel (0) target = $region13
      $region12: #{reverse.1} parent=4 // pred_region
        %s12 = ssub.s32 16, 1
        loop: start=0, step=1, limit=1
        $region14: #{reverse.1} parent=12 // loop_pre_header
          _
        $region15: #{reverse.1} parent=12 // loop_header
          %s14 = sphi 0, %s18
          %p15 = scmp.ge.s32.totalorder %s14, 1
          %s19 = sphi %s0, %s0
          %s20 = sphi [#allocation1], [#allocation1]
        $region16: #{reverse.1} parent=12 // loop_header_branch
          %17 = sbr.rel (%p15) target = $region20
        $region17: #{reverse.1} parent=12 // loop_body
          %v21 = vld [vmem:[%s19] sm:%s12]
          %22 = vst [vmem:[%s20] sm:%s12] %v21
          %v23 = vld [vmem:[%s19 + $0x4] sm:%s12]
          %24 = vst [vmem:[%s20 + $0x4] sm:%s12] %v23
        $region18: #{reverse.1} parent=12 // loop_footer
          %s18 = sadd.s32 1, %s14
        $region19: #{reverse.1} parent=12 // loop_footer_branch
          %13 = sbr.rel target = $region15
        $region20: #{reverse.1} parent=12 // loop_exit
          _
      $region13: #{reverse.1} parent=4 // pred_fallthru
        _
    $region5: #{reverse.1} parent=1 // pred_fallthru
      _
    %49 = vnop
    %s51 = sshll.u32 1, 4
    %s52 = ssub.s32 %s51, 1
    %s53 = scalar_lea.vmem [#allocation1], 4
    %v54 = vld [vmem:[%s53] sm:%s52]
    %s55 = scalar_lea.vmem [#allocation0], 8
    %56 = vst [vmem:[%s55] sm:%s52] %v54
    %v57 = vld [vmem:[#allocation1] sm:%s52]
    %58 = vst [vmem:[#allocation0] sm:%s52] %v57
    %v59 = vld [vmem:[#allocation0] sm:$0xff]
    %60 = vperm.xlu0 %4, %v59
    %v61 = vpop.permute.xlu0 %60
    %62 = vst [vmem:[#allocation2] sm:$0xff] %v61
    %s63 = scalar_lea.vmem [#allocation2], 8
    %s64 = scalar_lea.vmem [#allocation0], 8
    %v65 = vld [vmem:[%s64] sm:$0xff]
    %66 = vperm.xlu0 %4, %v65
    %v67 = vpop.permute.xlu0 %66
    %68 = vst [vmem:[%s63] sm:$0xff] %v67
    %s70 = sshll.u32 1, 4
    %s71 = ssub.s32 %s70, 1
    %v73 = vld [vmem:[#allocation2] sm:%s71]
    %s74 = sshll.u32 1, 4
    %s75 = ssub.s32 %s74, 1
    %76 = vst [vmem:[#allocation3] sm:%s75] %v73
    %s77 = scalar_lea.vmem [#allocation2], 8
    %v78 = vld [vmem:[%s77] sm:%s71]
    %s79 = sshll.u32 1, 4
    %s80 = ssub.s32 %s79, 1
    %s81 = scalar_lea.vmem [#allocation3], 4
    %82 = vst [vmem:[%s81] sm:%s80] %v78
    // Predicated region
    $region39: #{reverse.1} parent=1 // pred_check
      _
    $region40: #{reverse.1} parent=1 // pred_check_branch
      %84 = sbr.rel (0) target = $region42
    $region41: #{reverse.1} parent=1 // pred_region
      // Predicated region
      $region43: #{reverse.1} parent=41 // pred_check
        _
      $region44: #{reverse.1} parent=41 // pred_check_branch
        %86 = sbr.rel target = $region46
      $region45: #{reverse.1} parent=41 // pred_region
        // Predicated region
        $region58: #{reverse.1} parent=45 // pred_check
          _
        $region59: #{reverse.1} parent=45 // pred_check_branch
          %104 = sbr.rel (0) target = $region61
        $region60: #{reverse.1} parent=45 // pred_region
          loop: start=0, step=1, limit=1
          $region62: #{reverse.1} parent=60 // loop_pre_header
            _
          $region63: #{reverse.1} parent=60 // loop_header
            %s106 = sphi 0, %s110
            %p107 = scmp.ge.s32.totalorder %s106, 1
            %s111 = sphi [#allocation3], [#allocation3]
            %s112 = sphi %s1, %s1
          $region64: #{reverse.1} parent=60 // loop_header_branch
            %109 = sbr.rel (%p107) target = $region68
          $region65: #{reverse.1} parent=60 // loop_body
            _
          $region66: #{reverse.1} parent=60 // loop_footer
            %s110 = sadd.s32 1, %s106
          $region67: #{reverse.1} parent=60 // loop_footer_branch
            %105 = sbr.rel target = $region63
          $region68: #{reverse.1} parent=60 // loop_exit
            _
          %s114 = ssub.s32 16, 1
          loop: start=0, step=1, limit=1
          $region69: #{reverse.1} parent=60 // loop_pre_header
            _
          $region70: #{reverse.1} parent=60 // loop_header
            %s116 = sphi 0, %s120
            %p117 = scmp.ge.s32.totalorder %s116, 1
            %s121 = sphi [#allocation3], [#allocation3]
            %s122 = sphi %s1, %s1
          $region71: #{reverse.1} parent=60 // loop_header_branch
            %119 = sbr.rel (%p117) target = $region75
          $region72: #{reverse.1} parent=60 // loop_body
            %v123 = vld [vmem:[%s121] sm:%s114]
            %124 = vst [vmem:[%s122] sm:%s114] %v123
            %v125 = vld [vmem:[%s121 + $0x4] sm:%s114]
            %126 = vst [vmem:[%s122 + $0x4] sm:%s114] %v125
          $region73: #{reverse.1} parent=60 // loop_footer
            %s120 = sadd.s32 1, %s116
          $region74: #{reverse.1} parent=60 // loop_footer_branch
            %115 = sbr.rel target = $region70
          $region75: #{reverse.1} parent=60 // loop_exit
            _
        $region61: #{reverse.1} parent=45 // pred_fallthru
          _
      $region46: #{reverse.1} parent=41 // pred_fallthru
        _
      // Predicated region
      $region47: #{reverse.1} parent=41 // pred_check
        _
      $region48: #{reverse.1} parent=41 // pred_check_branch
        %88 = sbr.rel (0) target = $region50
      $region49: #{reverse.1} parent=41 // pred_region
        %s90 = ssub.s32 16, 1
        loop: start=0, step=1, limit=1
        $region51: #{reverse.1} parent=49 // loop_pre_header
          _
        $region52: #{reverse.1} parent=49 // loop_header
          %s92 = sphi 0, %s96
          %p93 = scmp.ge.s32.totalorder %s92, 1
          %s97 = sphi [#allocation3], [#allocation3]
          %s98 = sphi %s1, %s1
        $region53: #{reverse.1} parent=49 // loop_header_branch
          %95 = sbr.rel (%p93) target = $region57
        $region54: #{reverse.1} parent=49 // loop_body
          %v99 = vld [vmem:[%s97] sm:%s90]
          %100 = vst [vmem:[%s98] sm:%s90] %v99
          %v101 = vld [vmem:[%s97 + $0x4] sm:%s90]
          %102 = vst [vmem:[%s98 + $0x4] sm:%s90] %v101
        $region55: #{reverse.1} parent=49 // loop_footer
          %s96 = sadd.s32 1, %s92
        $region56: #{reverse.1} parent=49 // loop_footer_branch
          %91 = sbr.rel target = $region52
        $region57: #{reverse.1} parent=49 // loop_exit
          _
      $region50: #{reverse.1} parent=41 // pred_fallthru
        _
    $region42: #{reverse.1} parent=1 // pred_fallthru
      _
    %127 = vnop

// kernel: a_call__.1
$region0: #{a_call__.1}
  #allocation0 [shape = 'u32[]', space=smem, size = 0x4, offset = 0x4, fixed_abs, tag = 'smem constant byte address 0x4 - core index']
  #allocation1 [shape = 'u32[144,128]{1,0:T(1,128)}', space=vmem, size = 0x12000, scoped, tag = 'internal scratch']
  %s0 = inlined_call_operand.vmem [shape: f32[2,2,4,128], index: 0, kind: input, shape index: {}]
  %s1 = inlined_call_operand.vmem [shape: f32[2,4,4,128], index: 1, kind: input, shape index: {}]
  %s2 = inlined_call_operand.vmem [shape: f32[2,4,128], index: 2, kind: input, shape index: {}]
  %s3 = inlined_call_operand.vmem [shape: f32[2,2,4,128], index: 3, kind: output, shape index: {}]
  %s4 = sld [smem:[#allocation0]]
  $region22: #{a_call__.1} parent=0
    _
  %s6 = ssub.s32 1, %s4
  %s7 = scalar_select 0, %s6, %s4
  // Predicated region
  $region2: #{a_call__.1} parent=0 // pred_check
    _
  $region3: #{a_call__.1} parent=0 // pred_check_branch
    %9 = sbr.rel (0) target = $region5
  $region4: #{a_call__.1} parent=0 // pred_region
    _
  $region5: #{a_call__.1} parent=0 // pred_fallthru
    _
  // Predicated region
  $region6: #{a_call__.1} parent=0 // pred_check
    _
  $region7: #{a_call__.1} parent=0 // pred_check_branch
    %11 = sbr.rel (0) target = $region9
  $region8: #{a_call__.1} parent=0 // pred_region
    _
  $region9: #{a_call__.1} parent=0 // pred_fallthru
    _
  // Predicated region
  $region10: #{a_call__.1} parent=0 // pred_check
    _
  $region11: #{a_call__.1} parent=0 // pred_check_branch
    %13 = sbr.rel (0) target = $region13
  $region12: #{a_call__.1} parent=0 // pred_region
    _
  $region13: #{a_call__.1} parent=0 // pred_fallthru
    _
  %v14 = vld [vmem:[%s0] sm:$0xf]
  %v15 = vld [vmem:[%s0 + $0x4] sm:$0xf]
  %s16 = scalar_lea.vmem %s0, 8
  %v17 = vld [vmem:[%s16] sm:$0xf]
  %v18 = vld [vmem:[%s16 + $0x4] sm:$0xf]
  %v19 = vld [vmem:[%s1] sm:$0xf]
  %v20 = vld [vmem:[%s1 + $0x4] sm:$0xf]
  %v21 = vld [vmem:[%s1 + $0x8] sm:$0xf]
  %v22 = vld [vmem:[%s1 + $0xc] sm:$0xf]
  %s23 = scalar_lea.vmem %s1, 16
  %v24 = vld [vmem:[%s23] sm:$0xf]
  %v25 = vld [vmem:[%s23 + $0x4] sm:$0xf]
  %v26 = vld [vmem:[%s23 + $0x8] sm:$0xf]
  %v27 = vld [vmem:[%s23 + $0xc] sm:$0xf]
  %v31 = vunpack.c.l.s4 1966171168
  %v32 = vunpack.c.0.s8 %v31
  %v33 = vlaneseq
  %v34 = vshrl.u32 %v33, 7
  %v35 = vsub.s32 %v32, %v34
  %v36 = vrot.slane %v14, %v35
  %v37 = vcombine.high %v36, %v36
  %v39 = vunpack.c.l.s4 1966171168
  %v40 = vunpack.c.0.s8 %v39
  %v41 = vlaneseq
  %v42 = vshrl.u32 %v41, 7
  %v43 = vsub.s32 %v40, %v42
  %v44 = vrot.slane %v36, %v43
  %v46 = vunpack.c.l.s4 1966171168
  %v47 = vunpack.c.0.s8 %v46
  %v48 = vlaneseq
  %v49 = vshrl.u32 %v48, 7
  %v50 = vsub.s32 %v47, %v49
  %v51 = vrot.slane %v37, %v50
  %v52 = vcombine.high %v44, %v44
  %v53 = vcombine.high %v51, %v51
  %v55 = vunpack.c.l.s4 1966171168
  %v56 = vunpack.c.0.s8 %v55
  %v57 = vlaneseq
  %v58 = vshrl.u32 %v57, 7
  %v59 = vsub.s32 %v56, %v58
  %v60 = vrot.slane %v15, %v59
  %v61 = vcombine.high %v60, %v60
  %v63 = vunpack.c.l.s4 1966171168
  %v64 = vunpack.c.0.s8 %v63
  %v65 = vlaneseq
  %v66 = vshrl.u32 %v65, 7
  %v67 = vsub.s32 %v64, %v66
  %v68 = vrot.slane %v60, %v67
  %v70 = vunpack.c.l.s4 1966171168
  %v71 = vunpack.c.0.s8 %v70
  %v72 = vlaneseq
  %v73 = vshrl.u32 %v72, 7
  %v74 = vsub.s32 %v71, %v73
  %v75 = vrot.slane %v61, %v74
  %v76 = vcombine.high %v68, %v68
  %v77 = vcombine.high %v75, %v75
  %v81 = vunpack.c.l.s4 1966171168
  %v82 = vunpack.c.0.s8 %v81
  %v83 = vlaneseq
  %v84 = vshrl.u32 %v83, 7
  %v85 = vsub.s32 %v82, %v84
  %v86 = vrot.slane %v17, %v85
  %v87 = vcombine.high %v86, %v86
  %v89 = vunpack.c.l.s4 1966171168
  %v90 = vunpack.c.0.s8 %v89
  %v91 = vlaneseq
  %v92 = vshrl.u32 %v91, 7
  %v93 = vsub.s32 %v90, %v92
  %v94 = vrot.slane %v86, %v93
  %v96 = vunpack.c.l.s4 1966171168
  %v97 = vunpack.c.0.s8 %v96
  %v98 = vlaneseq
  %v99 = vshrl.u32 %v98, 7
  %v100 = vsub.s32 %v97, %v99
  %v101 = vrot.slane %v87, %v100
  %v102 = vcombine.high %v94, %v94
  %v103 = vcombine.high %v101, %v101
  %v105 = vunpack.c.l.s4 1966171168
  %v106 = vunpack.c.0.s8 %v105
  %v107 = vlaneseq
  %v108 = vshrl.u32 %v107, 7
  %v109 = vsub.s32 %v106, %v108
  %v110 = vrot.slane %v18, %v109
  %v111 = vcombine.high %v110, %v110
  %v113 = vunpack.c.l.s4 1966171168
  %v114 = vunpack.c.0.s8 %v113
  %v115 = vlaneseq
  %v116 = vshrl.u32 %v115, 7
  %v117 = vsub.s32 %v114, %v116
  %v118 = vrot.slane %v110, %v117
  %v120 = vunpack.c.l.s4 1966171168
  %v121 = vunpack.c.0.s8 %v120
  %v122 = vlaneseq
  %v123 = vshrl.u32 %v122, 7
  %v124 = vsub.s32 %v121, %v123
  %v125 = vrot.slane %v111, %v124
  %v126 = vcombine.high %v118, %v118
  %v127 = vcombine.high %v125, %v125
  %v128 = vlaneseq
  %v129 = vshrl.u32 %v128, 7
  %v130 = vsub.s32 0, %v129
  %v131 = vrot.slane %v44, %v130
  %v132 = vlaneseq
  %v133 = vshrl.u32 %v132, 7
  %v134 = vsub.s32 0, %v133
  %v135 = vrot.slane %v51, %v134
  %v136 = vlaneseq
  %v137 = vshrl.u32 %v136, 7
  %v138 = vsub.s32 0, %v137
  %v139 = vrot.slane %v52, %v138
  %v140 = vlaneseq
  %v141 = vshrl.u32 %v140, 7
  %v142 = vsub.s32 0, %v141
  %v143 = vrot.slane %v53, %v142
  %v144 = vlaneseq
  %v145 = vshrl.u32 %v144, 7
  %v146 = vsub.s32 0, %v145
  %v147 = vrot.slane %v68, %v146
  %v148 = vlaneseq
  %v149 = vshrl.u32 %v148, 7
  %v150 = vsub.s32 0, %v149
  %v151 = vrot.slane %v75, %v150
  %v152 = vlaneseq
  %v153 = vshrl.u32 %v152, 7
  %v154 = vsub.s32 0, %v153
  %v155 = vrot.slane %v76, %v154
  %v156 = vlaneseq
  %v157 = vshrl.u32 %v156, 7
  %v158 = vsub.s32 0, %v157
  %v159 = vrot.slane %v77, %v158
  %v168 = vmul.f32 %v131, %v19
  %v169 = vmul.f32 %v135, %v20
  %v170 = vmul.f32 %v139, %v21
  %v171 = vmul.f32 %v143, %v22
  %v172 = vmul.f32 %v147, %v19
  %v173 = vmul.f32 %v151, %v20
  %v174 = vmul.f32 %v155, %v21
  %v175 = vmul.f32 %v159, %v22
  %v176 = vlaneseq
  %v177 = vshrl.u32 %v176, 7
  %v178 = vsub.s32 0, %v177
  %v179 = vrot.slane %v94, %v178
  %v180 = vlaneseq
  %v181 = vshrl.u32 %v180, 7
  %v182 = vsub.s32 0, %v181
  %v183 = vrot.slane %v101, %v182
  %v184 = vlaneseq
  %v185 = vshrl.u32 %v184, 7
  %v186 = vsub.s32 0, %v185
  %v187 = vrot.slane %v102, %v186
  %v188 = vlaneseq
  %v189 = vshrl.u32 %v188, 7
  %v190 = vsub.s32 0, %v189
  %v191 = vrot.slane %v103, %v190
  %v192 = vlaneseq
  %v193 = vshrl.u32 %v192, 7
  %v194 = vsub.s32 0, %v193
  %v195 = vrot.slane %v118, %v194
  %v196 = vlaneseq
  %v197 = vshrl.u32 %v196, 7
  %v198 = vsub.s32 0, %v197
  %v199 = vrot.slane %v125, %v198
  %v200 = vlaneseq
  %v201 = vshrl.u32 %v200, 7
  %v202 = vsub.s32 0, %v201
  %v203 = vrot.slane %v126, %v202
  %v204 = vlaneseq
  %v205 = vshrl.u32 %v204, 7
  %v206 = vsub.s32 0, %v205
  %v207 = vrot.slane %v127, %v206
  %v216 = vmul.f32 %v179, %v24
  %v217 = vmul.f32 %v183, %v25
  %v218 = vmul.f32 %v187, %v26
  %v219 = vmul.f32 %v191, %v27
  %v220 = vmul.f32 %v195, %v24
  %v221 = vmul.f32 %v199, %v25
  %v222 = vmul.f32 %v203, %v26
  %v223 = vmul.f32 %v207, %v27
  %v224 = vsub.f32 %v168, %v216
  %v225 = vsub.f32 %v169, %v217
  %v226 = vsub.f32 %v170, %v218
  %v227 = vsub.f32 %v171, %v219
  %v228 = vsub.f32 %v172, %v220
  %v229 = vsub.f32 %v173, %v221
  %v230 = vsub.f32 %v174, %v222
  %v231 = vsub.f32 %v175, %v223
  %vm232 = vcmask 1043456
  %v233 = vsel %vm232, %v224, 0.0
  %v234 = vsel %vm232, %v225, 0.0
  %v235 = vadd.f32 %v233, %v234
  %v236 = vsel %vm232, %v226, 0.0
  %v237 = vadd.f32 %v235, %v236
  %v238 = vsel %vm232, %v227, 0.0
  %v239 = vadd.f32 %v237, %v238
  %v240 = vsel %vm232, %v228, 0.0
  %v241 = vsel %vm232, %v229, 0.0
  %v242 = vadd.f32 %v240, %v241
  %v243 = vsel %vm232, %v230, 0.0
  %v244 = vadd.f32 %v242, %v243
  %v245 = vsel %vm232, %v231, 0.0
  %v246 = vadd.f32 %v244, %v245
  %v247 = vmul.f32 %v131, %v24
  %v248 = vmul.f32 %v135, %v25
  %v249 = vmul.f32 %v139, %v26
  %v250 = vmul.f32 %v143, %v27
  %v251 = vmul.f32 %v147, %v24
  %v252 = vmul.f32 %v151, %v25
  %v253 = vmul.f32 %v155, %v26
  %v254 = vmul.f32 %v159, %v27
  %v255 = vmul.f32 %v179, %v19
  %v256 = vmul.f32 %v183, %v20
  %v257 = vmul.f32 %v187, %v21
  %v258 = vmul.f32 %v191, %v22
  %v259 = vmul.f32 %v195, %v19
  %v260 = vmul.f32 %v199, %v20
  %v261 = vmul.f32 %v203, %v21
  %v262 = vmul.f32 %v207, %v22
  %v263 = vadd.f32 %v247, %v255
  %v264 = vadd.f32 %v248, %v256
  %v265 = vadd.f32 %v249, %v257
  %v266 = vadd.f32 %v250, %v258
  %v267 = vadd.f32 %v251, %v259
  %v268 = vadd.f32 %v252, %v260
  %v269 = vadd.f32 %v253, %v261
  %v270 = vadd.f32 %v254, %v262
  %v271 = vsel %vm232, %v263, 0.0
  %v272 = vsel %vm232, %v264, 0.0
  %v273 = vadd.f32 %v271, %v272
  %v274 = vsel %vm232, %v265, 0.0
  %v275 = vadd.f32 %v273, %v274
  %v276 = vsel %vm232, %v266, 0.0
  %v277 = vadd.f32 %v275, %v276
  %v278 = vsel %vm232, %v267, 0.0
  %v279 = vsel %vm232, %v268, 0.0
  %v280 = vadd.f32 %v278, %v279
  %v281 = vsel %vm232, %v269, 0.0
  %v282 = vadd.f32 %v280, %v281
  %v283 = vsel %vm232, %v270, 0.0
  %v284 = vadd.f32 %v282, %v283
  %v285 = vld [vmem:[%s2] sm:$0xf]
  %v286 = vadd.f32 %v239, %v285
  %v287 = vadd.f32 %v246, %v285
  %288 = vst [vmem:[%s3] sm:$0xf] %v286
  %289 = vst [vmem:[%s3 + $0x4] sm:$0xf] %v287
  %s290 = scalar_lea.vmem %s2, 4
  %v291 = vld [vmem:[%s290] sm:$0xf]
  %v292 = vadd.f32 %v277, %v291
  %v293 = vadd.f32 %v284, %v291
  %s294 = scalar_lea.vmem %s3, 8
  %295 = vst [vmem:[%s294] sm:$0xf] %v292
  %296 = vst [vmem:[%s294 + $0x4] sm:$0xf] %v293
  // Predicated region
  $region14: #{a_call__.1} parent=0 // pred_check
    _
  $region15: #{a_call__.1} parent=0 // pred_check_branch
    %298 = sbr.rel (0) target = $region17
  $region16: #{a_call__.1} parent=0 // pred_region
    _
  $region17: #{a_call__.1} parent=0 // pred_fallthru
    _
  // Predicated region
  $region18: #{a_call__.1} parent=0 // pred_check
    _
  $region19: #{a_call__.1} parent=0 // pred_check_branch
    %300 = sbr.rel (0) target = $region21
  $region20: #{a_call__.1} parent=0 // pred_region
    _
  $region21: #{a_call__.1} parent=0 // pred_fallthru
    _

</llo_original>
